<compile_context>
chip_gen: v7x
topology: tpu7x:2x2x1
jax: 0.10.0
libtpu: 0.0.40
codegen_flags: <defaults>
</compile_context>

<pallas_src>
import functools

import jax
import jax.numpy as jnp
from jax import lax
from jax.experimental import pallas as pl
from jax.experimental.pallas import tpu as pltpu


def _finish_tile(sym, o_ref):
    """sigmoid(sym), zeroing the diagonal only on diagonal tiles."""
    adj = 0.5 * jnp.tanh(0.5 * sym) + 0.5            # sigmoid via a single EUP op
    i = pl.program_id(0)
    j = pl.program_id(1)

    @pl.when(i == j)
    def _():
        t = o_ref.shape[0]
        row = lax.broadcasted_iota(jnp.int32, (t, t), 0)
        col = lax.broadcasted_iota(jnp.int32, (t, t), 1)
        o_ref[...] = jnp.where(row == col, jnp.float32(0.0), adj)

    @pl.when(i != j)
    def _():
        o_ref[...] = adj


# ---------------------------------------------------------------------------
# Path A (real TPU backend): in-kernel hardware PRNG, per-tile reseeding.
# ---------------------------------------------------------------------------
def _tile_uniform(seed, bi, bj, t):
    """Uniform [0, 1) (t, t) tile, deterministic in (seed, bi, bj)."""
    pltpu.prng_seed(seed, bi, bj)
    bits = pltpu.bitcast(pltpu.prng_random_bits((t, t)), jnp.uint32)
    # Build a float32 in [1, 2) from the top 23 random bits, then subtract 1.
    mant = (bits >> jnp.uint32(9)) | jnp.uint32(0x3F800000)
    return pltpu.bitcast(mant, jnp.float32) - 1.0


def _random_adj_prng_kernel(seed_ref, o_ref):
    i = pl.program_id(0)
    j = pl.program_id(1)
    t = o_ref.shape[0]
    u_ij = _tile_uniform(seed_ref[0], i, j, t)
    u_ji = _tile_uniform(seed_ref[0], j, i, t)        # partner tile, regenerated
    _finish_tile((u_ij + u_ji.T) * 0.5, o_ref)


@functools.partial(jax.jit, static_argnames=("n_pad", "tile"))
def _random_adj_prng(seed_arr, *, n_pad, tile):
    grid = (n_pad // tile, n_pad // tile)
    return pl.pallas_call(
        _random_adj_prng_kernel,
        out_shape=jax.ShapeDtypeStruct((n_pad, n_pad), jnp.float32),
        grid=grid,
        in_specs=[pl.BlockSpec(memory_space=pltpu.MemorySpace.SMEM)],
        out_specs=pl.BlockSpec((tile, tile), lambda i, j: (i, j)),
        compiler_params=pltpu.CompilerParams(
            dimension_semantics=("parallel", "parallel")),
    )(seed_arr)


# ---------------------------------------------------------------------------
# Path B (interpret / non-TPU fallback): host-generated uniforms streamed
# through the same tiled symmetrize+sigmoid kernel.
# ---------------------------------------------------------------------------
def _random_adj_sym_kernel(u_ij_ref, u_ji_ref, o_ref):
    _finish_tile((u_ij_ref[...] + u_ji_ref[...].T) * 0.5, o_ref)


@functools.partial(jax.jit, static_argnames=("tile",))
def _random_adj_from_uniform(u, *, tile):
    n_pad = u.shape[0]
    grid = (n_pad // tile, n_pad // tile)
    return pl.pallas_call(
        _random_adj_sym_kernel,
        out_shape=jax.ShapeDtypeStruct((n_pad, n_pad), jnp.float32),
        grid=grid,
        in_specs=[pl.BlockSpec((tile, tile), lambda i, j: (i, j)),
                  pl.BlockSpec((tile, tile), lambda i, j: (j, i))],
        out_specs=pl.BlockSpec((tile, tile), lambda i, j: (i, j)),
        compiler_params=pltpu.CompilerParams(
            dimension_semantics=("parallel", "parallel")),
    )(u, u)


def _pick_tile(n_pad):
    for t in (512, 256, 128):
        if n_pad % t == 0:
            return t
    return 128  # unreachable: n_pad is always a multiple of 128


def random_adj(n, seed=0):
    """Pallas equivalent of RandomAdj.forward for a graph with n nodes."""
    n_pad = ((n + 127) // 128) * 128          # lane-dense tiles, unmasked stores
    tile = _pick_tile(n_pad)
    if jax.default_backend() == "tpu":
        seed_arr = jnp.asarray([seed], dtype=jnp.int32)
        adj = _random_adj_prng(seed_arr, n_pad=n_pad, tile=tile)
    else:
        # TODO(synk): pltpu.prng_seed/prng_random_bits have no lowering outside the
        # Mosaic TPU backend; interpret-mode fallback feeds host-generated uniforms.
        u = jax.random.uniform(jax.random.PRNGKey(seed), (n_pad, n_pad), jnp.float32)
        adj = _random_adj_from_uniform(u, tile=tile)
    return adj[:n, :n]


class RandomAdjPallas:
    """JAX/Pallas port of RandomAdj. Parameters mirror __init__ but, exactly like
    the PyTorch forward(), they are unused."""

    def __init__(self, nfeat, nhid=128, nlayers=3):
        key = jax.random.PRNGKey(42)
        dims = [(nfeat * 2, nhid)] + [(nhid, nhid)] * (nlayers - 2) + [(nhid, 1)]
        self.params = []
        for din, dout in dims:
            key, kw = jax.random.split(key)
            w = jax.random.normal(kw, (din, dout), jnp.float32) / jnp.sqrt(din)
            self.params.append((w, jnp.zeros((dout,), jnp.float32)))
        # BatchNorm1d params (unused in forward, kept for shape fidelity)
        self.bn_params = [(jnp.ones((nhid,), jnp.float32),
                           jnp.zeros((nhid,), jnp.float32))
                          for _ in range(nlayers - 1)]

    def forward(self, x, seed=0):
        return random_adj(x.shape[0], seed=seed)

    def inference(self, x, seed=0):
        return self.forward(x, seed)


if __name__ == "__main__":
    key = jax.random.PRNGKey(0)
    NFEAT = 16
    model = RandomAdjPallas(nfeat=NFEAT, nhid=32, nlayers=3)

    # n=128: tile-aligned single-tile case; n=300: ragged (padded to 384, 3x3 grid)
    # which also exercises the off-diagonal pl.when branch.
    for n in (128, 300):
        x = jax.random.normal(jax.random.fold_in(key, n), (n, NFEAT), jnp.float32)
        adj = jax.block_until_ready(model.forward(x, seed=0))

        assert adj.shape == (n, n)
        assert adj.dtype == jnp.float32
        assert jnp.allclose(adj, adj.T, atol=1e-6)               # symmetric
        assert jnp.allclose(jnp.diagonal(adj), 0.0)              # zero diagonal
        off = adj + jnp.eye(n, dtype=adj.dtype) * 0.6            # fill diag into range
        # sigmoid of values in [0, 1) lies in [0.5, 0.73106); allow tiny slack.
        assert bool(jnp.all((off >= 0.4999) & (off < 0.7315)))

    print("KERNEL_OK")
</pallas_src>

<mosaic_0001>
module attributes {stable_mosaic.version = 11 : i64} {
  func.func @_random_adj_sym_kernel(%arg0: i32, %arg1: i32, %arg2: memref<128x128xf32, #tpu.memory_space<vmem>>, %arg3: memref<128x128xf32, #tpu.memory_space<vmem>>, %arg4: memref<128x128xf32, #tpu.memory_space<vmem>>) attributes {dimension_semantics = [#tpu.dimension_semantics<parallel>, #tpu.dimension_semantics<parallel>], iteration_bounds = array<i64: 1, 1>, scalar_prefetch = 0 : i64, scratch_operands = 0 : i64, tpu.core_type = #tpu.core_type<tc>, window_params = [{transform_indices = @transform_0, window_bounds = array<i64: 128, 128>}, {transform_indices = @transform_1, window_bounds = array<i64: 128, 128>}, {transform_indices = @transform_2, window_bounds = array<i64: 128, 128>}]} {
    %c0 = arith.constant 0 : index
    %c0_0 = arith.constant 0 : index
    %0 = vector.load %arg2[%c0, %c0_0] : memref<128x128xf32, #tpu.memory_space<vmem>>, vector<128x128xf32>
    %c0_1 = arith.constant 0 : index
    %c0_2 = arith.constant 0 : index
    %1 = vector.load %arg3[%c0_1, %c0_2] : memref<128x128xf32, #tpu.memory_space<vmem>>, vector<128x128xf32>
    %2 = tpu.transpose %1, [1, 0] : vector<128x128xf32> -> vector<128x128xf32>
    %3 = arith.addf %0, %2 : vector<128x128xf32>
    %cst = arith.constant 5.000000e-01 : f32
    %4 = vector.broadcast %cst : f32 to vector<128x128xf32>
    %5 = arith.mulf %3, %4 : vector<128x128xf32>
    %cst_3 = arith.constant 5.000000e-01 : f32
    %6 = vector.broadcast %cst_3 : f32 to vector<128x128xf32>
    %7 = arith.mulf %6, %5 : vector<128x128xf32>
    %8 = math.tanh %7 : vector<128x128xf32>
    %cst_4 = arith.constant 5.000000e-01 : f32
    %9 = vector.broadcast %cst_4 : f32 to vector<128x128xf32>
    %10 = arith.mulf %9, %8 : vector<128x128xf32>
    %cst_5 = arith.constant 5.000000e-01 : f32
    %11 = vector.broadcast %cst_5 : f32 to vector<128x128xf32>
    %12 = arith.addf %10, %11 : vector<128x128xf32>
    %13 = arith.cmpi eq, %arg0, %arg1 : i32
    %14 = arith.extui %13 : i1 to i32
    %c0_i32 = arith.constant 0 : i32
    %15 = arith.cmpi ne, %14, %c0_i32 : i32
    scf.if %15 {
      %19 = tpu.iota {dimensions = array<i32: 0>} : vector<128x128xi32>
      %20 = tpu.iota {dimensions = array<i32: 1>} : vector<128x128xi32>
      %21 = arith.cmpi eq, %19, %20 : vector<128x128xi32>
      %cst_7 = arith.constant 0.000000e+00 : f32
      %22 = vector.broadcast %cst_7 : f32 to vector<128x128xf32>
      %23 = arith.select %21, %22, %12 : vector<128x128xi1>, vector<128x128xf32>
      %c0_8 = arith.constant 0 : index
      %c0_9 = arith.constant 0 : index
      %24 = vector.load %arg4[%c0_8, %c0_9] : memref<128x128xf32, #tpu.memory_space<vmem>>, vector<128x128xf32>
      tpu.vector_store %arg4[%c0_8, %c0_9], %23 {strides = array<i32>} : memref<128x128xf32, #tpu.memory_space<vmem>>, vector<128x128xf32>,
    } else {
    }
    %16 = arith.cmpi ne, %arg0, %arg1 : i32
    %17 = arith.extui %16 : i1 to i32
    %c0_i32_6 = arith.constant 0 : i32
    %18 = arith.cmpi ne, %17, %c0_i32_6 : i32
    scf.if %18 {
      %c0_7 = arith.constant 0 : index
      %c0_8 = arith.constant 0 : index
      %19 = vector.load %arg4[%c0_7, %c0_8] : memref<128x128xf32, #tpu.memory_space<vmem>>, vector<128x128xf32>
      tpu.vector_store %arg4[%c0_7, %c0_8], %12 {strides = array<i32>} : memref<128x128xf32, #tpu.memory_space<vmem>>, vector<128x128xf32>,
    } else {
    }
    return
  }
  func.func @transform_0(%arg0: i32, %arg1: i32) -> (i32, i32) {
    %c0_i32 = arith.constant 0 : i32
    return %arg0, %arg1 : i32, i32
  }
  func.func @transform_1(%arg0: i32, %arg1: i32) -> (i32, i32) {
    %c0_i32 = arith.constant 0 : i32
    return %arg1, %arg0 : i32, i32
  }
  func.func @transform_2(%arg0: i32, %arg1: i32) -> (i32, i32) {
    %c0_i32 = arith.constant 0 : i32
    return %arg0, %arg1 : i32, i32
  }
}

</mosaic_0001>

<llo_original>
// kernel: _random_adj_from_uniform.1
$region0: #{_random_adj_from_uniform.1}
  #allocation0 [shape = 'u32[]', space=smem, size = 0x4, offset = 0x4, fixed_abs, tag = 'smem constant byte address 0x4 - core index']
  #allocation1 [shape = 'u32[144,128]{1,0:T(1,128)}', space=vmem, size = 0x12000, scoped, tag = 'internal scratch']
  %s0 = inlined_call_operand.hbm [shape: f32[128,128], index: 0, kind: input, shape index: {}, may-alias: {0,1}]
  %s1 = inlined_call_operand.hbm [shape: f32[128,128], index: 1, kind: input, shape index: {}, may-alias: {0,1}]
  %s2 = inlined_call_operand.hbm [shape: f32[128,128], index: 2, kind: output, shape index: {}]
  %s3 = sld [smem:[#allocation0]]
  $region34: #{_random_adj_from_uniform.1} parent=0
    _
  %s5 = ssub.s32 1, %s3
  %s6 = scalar_select 0, %s5, %s3
  $region1: #{_random_adj_from_uniform.1} parent=0
    #allocation2 [shape = 'u8[65536]{0}', space=vmem, size = 0x10000, scoped, tag = 'input window, operand 0, single buffered']
    #allocation3 [shape = 's32[1]{0}', space=sflag, size = 0x4, scoped, tag = 'scoped memory for _random_adj_from_uniform.1']
    #allocation4 [shape = 's32[1]{0}', space=sflag, size = 0x4, scoped, tag = 'scoped memory for _random_adj_from_uniform.1']
    #allocation5 [shape = 'u8[65536]{0}', space=vmem, size = 0x10000, scoped, tag = 'input window, operand 1, single buffered']
    #allocation6 [shape = 's32[1]{0}', space=sflag, size = 0x4, scoped, tag = 'scoped memory for _random_adj_from_uniform.1']
    #allocation7 [shape = 'u8[65536]{0}', space=vmem, size = 0x10000, scoped, tag = 'output window, operand 0, single buffered']
    %7 = vsyncpa [#allocation3], 0
    %8 = vsyncpa [#allocation6], 0
    %9 = vsyncpa [#allocation4], 0
    // Predicated region
    $region2: #{_random_adj_from_uniform.1} parent=1 // pred_check
      _
    $region3: #{_random_adj_from_uniform.1} parent=1 // pred_check_branch
      %11 = sbr.rel (0) target = $region5
    $region4: #{_random_adj_from_uniform.1} parent=1 // pred_region
      %s13 = ssub.s32 2048, 2048
      %14 = vsyncadd [#allocation3], %s13
      %s15 = sshll.u32 [#allocation2], 4
      %s16 = int_to_ptr.vmem [resolvable:$true] %s15
      %21 = dma.hbm_to_vmem [thread:$0]  %s0, 2048, %s16, [#allocation3], 128, 128, 8
    $region5: #{_random_adj_from_uniform.1} parent=1 // pred_fallthru
      _
    // Predicated region
    $region6: #{_random_adj_from_uniform.1} parent=1 // pred_check
      _
    $region7: #{_random_adj_from_uniform.1} parent=1 // pred_check_branch
      %23 = sbr.rel (0) target = $region9
    $region8: #{_random_adj_from_uniform.1} parent=1 // pred_region
      %s25 = ssub.s32 2048, 2048
      %26 = vsyncadd [#allocation6], %s25
      %s27 = sshll.u32 [#allocation5], 4
      %s28 = int_to_ptr.vmem [resolvable:$true] %s27
      %33 = dma.hbm_to_vmem [thread:$0]  %s1, 2048, %s28, [#allocation6], 128, 128, 8
    $region9: #{_random_adj_from_uniform.1} parent=1 // pred_fallthru
      _
    // Predicated region
    $region10: #{_random_adj_from_uniform.1} parent=1 // pred_check
      _
    $region11: #{_random_adj_from_uniform.1} parent=1 // pred_check_branch
      %35 = sbr.rel (0) target = $region13
    $region12: #{_random_adj_from_uniform.1} parent=1 // pred_region
      %36 = dma.done [#allocation3], 2048
    $region13: #{_random_adj_from_uniform.1} parent=1 // pred_fallthru
      _
    // Predicated region
    $region14: #{_random_adj_from_uniform.1} parent=1 // pred_check
      _
    $region15: #{_random_adj_from_uniform.1} parent=1 // pred_check_branch
      %38 = sbr.rel (0) target = $region17
    $region16: #{_random_adj_from_uniform.1} parent=1 // pred_region
      %39 = dma.done [#allocation6], 2048
    $region17: #{_random_adj_from_uniform.1} parent=1 // pred_fallthru
      _
    %v40 = vld [vmem:[#allocation2] sm:$0xff]
    %v41 = vld [vmem:[#allocation2 + $0x8] sm:$0xff]
    %v42 = vld [vmem:[#allocation2 + $0x10] sm:$0xff]
    %v43 = vld [vmem:[#allocation2 + $0x18] sm:$0xff]
    %v44 = vld [vmem:[#allocation2 + $0x20] sm:$0xff]
    %v45 = vld [vmem:[#allocation2 + $0x28] sm:$0xff]
    %v46 = vld [vmem:[#allocation2 + $0x30] sm:$0xff]
    %v47 = vld [vmem:[#allocation2 + $0x38] sm:$0xff]
    %v48 = vld [vmem:[#allocation2 + $0x40] sm:$0xff]
    %v49 = vld [vmem:[#allocation2 + $0x48] sm:$0xff]
    %v50 = vld [vmem:[#allocation2 + $0x50] sm:$0xff]
    %v51 = vld [vmem:[#allocation2 + $0x58] sm:$0xff]
    %v52 = vld [vmem:[#allocation2 + $0x60] sm:$0xff]
    %v53 = vld [vmem:[#allocation2 + $0x68] sm:$0xff]
    %v54 = vld [vmem:[#allocation2 + $0x70] sm:$0xff]
    %v55 = vld [vmem:[#allocation2 + $0x78] sm:$0xff]
    %v56 = vld [vmem:[#allocation5] sm:$0xff]
    %v57 = vld [vmem:[#allocation5 + $0x8] sm:$0xff]
    %v58 = vld [vmem:[#allocation5 + $0x10] sm:$0xff]
    %v59 = vld [vmem:[#allocation5 + $0x18] sm:$0xff]
    %v60 = vld [vmem:[#allocation5 + $0x20] sm:$0xff]
    %v61 = vld [vmem:[#allocation5 + $0x28] sm:$0xff]
    %v62 = vld [vmem:[#allocation5 + $0x30] sm:$0xff]
    %v63 = vld [vmem:[#allocation5 + $0x38] sm:$0xff]
    %v64 = vld [vmem:[#allocation5 + $0x40] sm:$0xff]
    %v65 = vld [vmem:[#allocation5 + $0x48] sm:$0xff]
    %v66 = vld [vmem:[#allocation5 + $0x50] sm:$0xff]
    %v67 = vld [vmem:[#allocation5 + $0x58] sm:$0xff]
    %v68 = vld [vmem:[#allocation5 + $0x60] sm:$0xff]
    %v69 = vld [vmem:[#allocation5 + $0x68] sm:$0xff]
    %v70 = vld [vmem:[#allocation5 + $0x70] sm:$0xff]
    %v71 = vld [vmem:[#allocation5 + $0x78] sm:$0xff]
    %72 = vxpose.xlu0.b32.start [1/16] %v56, 128
    %73 = vxpose.xlu0.b32.cont [2/16] %v57, 128
    %74 = vxpose.xlu0.b32.cont [3/16] %v58, 128
    %75 = vxpose.xlu0.b32.cont [4/16] %v59, 128
    %76 = vxpose.xlu0.b32.cont [5/16] %v60, 128
    %77 = vxpose.xlu0.b32.cont [6/16] %v61, 128
    %78 = vxpose.xlu0.b32.cont [7/16] %v62, 128
    %79 = vxpose.xlu0.b32.cont [8/16] %v63, 128
    %80 = vxpose.xlu0.b32.cont [9/16] %v64, 128
    %81 = vxpose.xlu0.b32.cont [10/16] %v65, 128
    %82 = vxpose.xlu0.b32.cont [11/16] %v66, 128
    %83 = vxpose.xlu0.b32.cont [12/16] %v67, 128
    %84 = vxpose.xlu0.b32.cont [13/16] %v68, 128
    %85 = vxpose.xlu0.b32.cont [14/16] %v69, 128
    %86 = vxpose.xlu0.b32.cont [15/16] %v70, 128
    %87 = vxpose.xlu0.b32.end [16/16] %v71, 128
    %v88 = vpop.trf.xlu0
    %v89 = vpop.trf.xlu0
    %v90 = vpop.trf.xlu0
    %v91 = vpop.trf.xlu0
    %v92 = vpop.trf.xlu0
    %v93 = vpop.trf.xlu0
    %v94 = vpop.trf.xlu0
    %v95 = vpop.trf.xlu0
    %v96 = vpop.trf.xlu0
    %v97 = vpop.trf.xlu0
    %v98 = vpop.trf.xlu0
    %v99 = vpop.trf.xlu0
    %v100 = vpop.trf.xlu0
    %v101 = vpop.trf.xlu0
    %v102 = vpop.trf.xlu0
    %v103 = vpop.trf.xlu0
    %v104 = vadd.f32 %v40, %v88
    %v105 = vadd.f32 %v41, %v89
    %v106 = vadd.f32 %v42, %v90
    %v107 = vadd.f32 %v43, %v91
    %v108 = vadd.f32 %v44, %v92
    %v109 = vadd.f32 %v45, %v93
    %v110 = vadd.f32 %v46, %v94
    %v111 = vadd.f32 %v47, %v95
    %v112 = vadd.f32 %v48, %v96
    %v113 = vadd.f32 %v49, %v97
    %v114 = vadd.f32 %v50, %v98
    %v115 = vadd.f32 %v51, %v99
    %v116 = vadd.f32 %v52, %v100
    %v117 = vadd.f32 %v53, %v101
    %v118 = vadd.f32 %v54, %v102
    %v119 = vadd.f32 %v55, %v103
    %v120 = vmul.f32 %v104, 0.5
    %v121 = vmul.f32 %v105, 0.5
    %v122 = vmul.f32 %v106, 0.5
    %v123 = vmul.f32 %v107, 0.5
    %v124 = vmul.f32 %v108, 0.5
    %v125 = vmul.f32 %v109, 0.5
    %v126 = vmul.f32 %v110, 0.5
    %v127 = vmul.f32 %v111, 0.5
    %v128 = vmul.f32 %v112, 0.5
    %v129 = vmul.f32 %v113, 0.5
    %v130 = vmul.f32 %v114, 0.5
    %v131 = vmul.f32 %v115, 0.5
    %v132 = vmul.f32 %v116, 0.5
    %v133 = vmul.f32 %v117, 0.5
    %v134 = vmul.f32 %v118, 0.5
    %v135 = vmul.f32 %v119, 0.5
    %v136 = vmul.f32 %v120, 0.5
    %v137 = vmul.f32 %v121, 0.5
    %v138 = vmul.f32 %v122, 0.5
    %v139 = vmul.f32 %v123, 0.5
    %v140 = vmul.f32 %v124, 0.5
    %v141 = vmul.f32 %v125, 0.5
    %v142 = vmul.f32 %v126, 0.5
    %v143 = vmul.f32 %v127, 0.5
    %v144 = vmul.f32 %v128, 0.5
    %v145 = vmul.f32 %v129, 0.5
    %v146 = vmul.f32 %v130, 0.5
    %v147 = vmul.f32 %v131, 0.5
    %v148 = vmul.f32 %v132, 0.5
    %v149 = vmul.f32 %v133, 0.5
    %v150 = vmul.f32 %v134, 0.5
    %v151 = vmul.f32 %v135, 0.5
    %v152 = vtanh.pop %v136
    %v153 = vtanh.pop %v137
    %v154 = vtanh.pop %v138
    %v155 = vtanh.pop %v139
    %v156 = vtanh.pop %v140
    %v157 = vtanh.pop %v141
    %v158 = vtanh.pop %v142
    %v159 = vtanh.pop %v143
    %v160 = vtanh.pop %v144
    %v161 = vtanh.pop %v145
    %v162 = vtanh.pop %v146
    %v163 = vtanh.pop %v147
    %v164 = vtanh.pop %v148
    %v165 = vtanh.pop %v149
    %v166 = vtanh.pop %v150
    %v167 = vtanh.pop %v151
    %v168 = vmul.f32 %v152, 0.5
    %v169 = vmul.f32 %v153, 0.5
    %v170 = vmul.f32 %v154, 0.5
    %v171 = vmul.f32 %v155, 0.5
    %v172 = vmul.f32 %v156, 0.5
    %v173 = vmul.f32 %v157, 0.5
    %v174 = vmul.f32 %v158, 0.5
    %v175 = vmul.f32 %v159, 0.5
    %v176 = vmul.f32 %v160, 0.5
    %v177 = vmul.f32 %v161, 0.5
    %v178 = vmul.f32 %v162, 0.5
    %v179 = vmul.f32 %v163, 0.5
    %v180 = vmul.f32 %v164, 0.5
    %v181 = vmul.f32 %v165, 0.5
    %v182 = vmul.f32 %v166, 0.5
    %v183 = vmul.f32 %v167, 0.5
    %v184 = vadd.f32 %v168, 0.5
    %v185 = vadd.f32 %v169, 0.5
    %v186 = vadd.f32 %v170, 0.5
    %v187 = vadd.f32 %v171, 0.5
    %v188 = vadd.f32 %v172, 0.5
    %v189 = vadd.f32 %v173, 0.5
    %v190 = vadd.f32 %v174, 0.5
    %v191 = vadd.f32 %v175, 0.5
    %v192 = vadd.f32 %v176, 0.5
    %v193 = vadd.f32 %v177, 0.5
    %v194 = vadd.f32 %v178, 0.5
    %v195 = vadd.f32 %v179, 0.5
    %v196 = vadd.f32 %v180, 0.5
    %v197 = vadd.f32 %v181, 0.5
    %v198 = vadd.f32 %v182, 0.5
    %v199 = vadd.f32 %v183, 0.5
    %p200 = scmp.eq.s32.totalorder 0, 0
    // Predicated region
    $region18: #{_random_adj_from_uniform.1} parent=1 // pred_check
      %p201 = pneg %p200
    $region19: #{_random_adj_from_uniform.1} parent=1 // pred_check_branch
      %203 = sbr.rel (%p201) target = $region21
    $region20: #{_random_adj_from_uniform.1} parent=1 // pred_region
      %v204 = vlaneseq
      %v205 = vshrl.u32 %v204, 7
      %v206 = vadd.s32 %v205, 8
      %v207 = vadd.s32 %v205, 16
      %v208 = vadd.s32 %v205, 24
      %v209 = vadd.s32 %v205, 32
      %v210 = vadd.s32 %v205, 40
      %v211 = vadd.s32 %v205, 48
      %v212 = vadd.s32 %v205, 56
      %v213 = vadd.s32 %v205, 64
      %v214 = vadd.s32 %v205, 72
      %v215 = vadd.s32 %v205, 80
      %v216 = vadd.s32 %v205, 88
      %v217 = vadd.s32 %v205, 96
      %v218 = vadd.s32 %v205, 104
      %v219 = vadd.s32 %v205, 112
      %v220 = vadd.s32 %v205, 120
      %v221 = vlaneseq
      %v222 = vand.u32 %v221, 127
      %vm223 = vcmp.eq.s32.totalorder %v205, %v222
      %vm224 = vcmp.eq.s32.totalorder %v206, %v222
      %vm225 = vcmp.eq.s32.totalorder %v207, %v222
      %vm226 = vcmp.eq.s32.totalorder %v208, %v222
      %vm227 = vcmp.eq.s32.totalorder %v209, %v222
      %vm228 = vcmp.eq.s32.totalorder %v210, %v222
      %vm229 = vcmp.eq.s32.totalorder %v211, %v222
      %vm230 = vcmp.eq.s32.totalorder %v212, %v222
      %vm231 = vcmp.eq.s32.totalorder %v213, %v222
      %vm232 = vcmp.eq.s32.totalorder %v214, %v222
      %vm233 = vcmp.eq.s32.totalorder %v215, %v222
      %vm234 = vcmp.eq.s32.totalorder %v216, %v222
      %vm235 = vcmp.eq.s32.totalorder %v217, %v222
      %vm236 = vcmp.eq.s32.totalorder %v218, %v222
      %vm237 = vcmp.eq.s32.totalorder %v219, %v222
      %vm238 = vcmp.eq.s32.totalorder %v220, %v222
      %v239 = vsel %vm223, 0.0, %v184
      %v240 = vsel %vm224, 0.0, %v185
      %v241 = vsel %vm225, 0.0, %v186
      %v242 = vsel %vm226, 0.0, %v187
      %v243 = vsel %vm227, 0.0, %v188
      %v244 = vsel %vm228, 0.0, %v189
      %v245 = vsel %vm229, 0.0, %v190
      %v246 = vsel %vm230, 0.0, %v191
      %v247 = vsel %vm231, 0.0, %v192
      %v248 = vsel %vm232, 0.0, %v193
      %v249 = vsel %vm233, 0.0, %v194
      %v250 = vsel %vm234, 0.0, %v195
      %v251 = vsel %vm235, 0.0, %v196
      %v252 = vsel %vm236, 0.0, %v197
      %v253 = vsel %vm237, 0.0, %v198
      %v254 = vsel %vm238, 0.0, %v199
      %255 = vst [vmem:[#allocation7] sm:$0xff] %v239
      %256 = vst [vmem:[#allocation7 + $0x8] sm:$0xff] %v240
      %257 = vst [vmem:[#allocation7 + $0x10] sm:$0xff] %v241
      %258 = vst [vmem:[#allocation7 + $0x18] sm:$0xff] %v242
      %259 = vst [vmem:[#allocation7 + $0x20] sm:$0xff] %v243
      %260 = vst [vmem:[#allocation7 + $0x28] sm:$0xff] %v244
      %261 = vst [vmem:[#allocation7 + $0x30] sm:$0xff] %v245
      %262 = vst [vmem:[#allocation7 + $0x38] sm:$0xff] %v246
      %263 = vst [vmem:[#allocation7 + $0x40] sm:$0xff] %v247
      %264 = vst [vmem:[#allocation7 + $0x48] sm:$0xff] %v248
      %265 = vst [vmem:[#allocation7 + $0x50] sm:$0xff] %v249
      %266 = vst [vmem:[#allocation7 + $0x58] sm:$0xff] %v250
      %267 = vst [vmem:[#allocation7 + $0x60] sm:$0xff] %v251
      %268 = vst [vmem:[#allocation7 + $0x68] sm:$0xff] %v252
      %269 = vst [vmem:[#allocation7 + $0x70] sm:$0xff] %v253
      %270 = vst [vmem:[#allocation7 + $0x78] sm:$0xff] %v254
    $region21: #{_random_adj_from_uniform.1} parent=1 // pred_fallthru
      _
    %p271 = scmp.ne.s32.totalorder 0, 0
    // Predicated region
    $region22: #{_random_adj_from_uniform.1} parent=1 // pred_check
      %p272 = pneg %p271
    $region23: #{_random_adj_from_uniform.1} parent=1 // pred_check_branch
      %274 = sbr.rel (%p272) target = $region25
    $region24: #{_random_adj_from_uniform.1} parent=1 // pred_region
      %275 = vst [vmem:[#allocation7] sm:$0xff] %v184
      %276 = vst [vmem:[#allocation7 + $0x8] sm:$0xff] %v185
      %277 = vst [vmem:[#allocation7 + $0x10] sm:$0xff] %v186
      %278 = vst [vmem:[#allocation7 + $0x18] sm:$0xff] %v187
      %279 = vst [vmem:[#allocation7 + $0x20] sm:$0xff] %v188
      %280 = vst [vmem:[#allocation7 + $0x28] sm:$0xff] %v189
      %281 = vst [vmem:[#allocation7 + $0x30] sm:$0xff] %v190
      %282 = vst [vmem:[#allocation7 + $0x38] sm:$0xff] %v191
      %283 = vst [vmem:[#allocation7 + $0x40] sm:$0xff] %v192
      %284 = vst [vmem:[#allocation7 + $0x48] sm:$0xff] %v193
      %285 = vst [vmem:[#allocation7 + $0x50] sm:$0xff] %v194
      %286 = vst [vmem:[#allocation7 + $0x58] sm:$0xff] %v195
      %287 = vst [vmem:[#allocation7 + $0x60] sm:$0xff] %v196
      %288 = vst [vmem:[#allocation7 + $0x68] sm:$0xff] %v197
      %289 = vst [vmem:[#allocation7 + $0x70] sm:$0xff] %v198
      %290 = vst [vmem:[#allocation7 + $0x78] sm:$0xff] %v199
    $region25: #{_random_adj_from_uniform.1} parent=1 // pred_fallthru
      _
    // Predicated region
    $region26: #{_random_adj_from_uniform.1} parent=1 // pred_check
      _
    $region27: #{_random_adj_from_uniform.1} parent=1 // pred_check_branch
      %292 = sbr.rel (0) target = $region29
    $region28: #{_random_adj_from_uniform.1} parent=1 // pred_region
      %s294 = ssub.s32 2048, 2048
      %295 = vsyncadd [#allocation4], %s294
      %s296 = sshll.u32 [#allocation7], 4
      %s297 = int_to_ptr.vmem [resolvable:$true] %s296
      %302 = dma.vmem_to_hbm [thread:$0]  %s297, 2048, %s2, [#allocation4], 128, 128, 8
    $region29: #{_random_adj_from_uniform.1} parent=1 // pred_fallthru
      _
    // Predicated region
    $region30: #{_random_adj_from_uniform.1} parent=1 // pred_check
      _
    $region31: #{_random_adj_from_uniform.1} parent=1 // pred_check_branch
      %304 = sbr.rel (0) target = $region33
    $region32: #{_random_adj_from_uniform.1} parent=1 // pred_region
      %305 = dma.done [#allocation4], 2048
    $region33: #{_random_adj_from_uniform.1} parent=1 // pred_fallthru
      _
    %306 = vsyncpa [#allocation3], 1
    %307 = vsyncpa [#allocation6], 1
    %308 = vsyncpa [#allocation4], 1

</llo_original>
